<compile_context>
chip_gen: v7x
topology: tpu7x:2x2x1
jax: 0.10.0
libtpu: 0.0.40
codegen_flags: <defaults>
</compile_context>

<pallas_src>
import jax
import jax.numpy as jnp
from jax.experimental import pallas as pl
from jax.experimental.pallas import tpu as pltpu

_INV_LN2 = 1.4426950408889634  # 1 / ln(2)
_LANES = 128


def _kl_div_kernel(in_ref, out_dist_ref, partial_ref):
    """One (TM, 128) tile: x * log2(x / y), reduced over the sublane axis.

    Writes a lane-dense (1, 128) partial-sum row; the final cross-lane /
    cross-block reduction is finished outside the kernel.
    """
    x = in_ref[...].astype(jnp.float32)
    y = out_dist_ref[...].astype(jnp.float32)
    # x * log2(x / y) == x * ln(x / y) * (1 / ln 2)   (EUP log + VPU mul)
    contrib = x * (jnp.log(x / y) * _INV_LN2)
    partial_ref[...] = jnp.sum(contrib, axis=0, keepdims=True)


def kl_divergence_loss(input_dist: jax.Array,
                       output_dist: jax.Array,
                       *,
                       block_rows: int = 512) -> jax.Array:
    """Pallas-backed equivalent of KLDivergenceLoss.forward(input, output)."""
    assert input_dist.shape == output_dist.shape, "shape mismatch"
    total = input_dist.size

    x = input_dist.reshape(-1).astype(jnp.float32)
    y = output_dist.reshape(-1).astype(jnp.float32)

    # Lane-dense layout: flatten to (rows, 128), sublane-align, then tile.
    rows = -(-total // _LANES)
    rows8 = -(-rows // 8) * 8                       # multiple of 8 sublanes
    tm = min(block_rows, rows8)                     # tile rows (multiple of 8)
    grid = -(-rows8 // tm)
    padded_rows = grid * tm
    pad = padded_rows * _LANES - total
    if pad:
        # Pad both with 1.0: 1 * log2(1/1) == 0, contributes nothing.
        ones = jnp.ones((pad,), jnp.float32)
        x = jnp.concatenate([x, ones])
        y = jnp.concatenate([y, ones])
    x2 = x.reshape(padded_rows, _LANES)
    y2 = y.reshape(padded_rows, _LANES)

    partials = pl.pallas_call(
        _kl_div_kernel,
        out_shape=jax.ShapeDtypeStruct((grid, _LANES), jnp.float32),
        grid=(grid,),
        in_specs=[
            pl.BlockSpec((tm, _LANES), lambda i: (i, 0)),
            pl.BlockSpec((tm, _LANES), lambda i: (i, 0)),
        ],
        out_specs=pl.BlockSpec((1, _LANES), lambda i: (i, 0)),
        compiler_params=pltpu.CompilerParams(
            dimension_semantics=("parallel",),
        ),
    )(x2, y2)

    # Final tiny reduction (grid x 128 values) in plain XLA.
    return jnp.sum(partials)


if __name__ == "__main__":
    key = jax.random.PRNGKey(0)
    k1, k2 = jax.random.split(key)

    # "Distributions of image pixels": small batch x channels x spatial.
    B, C, H, W = 2, 4, 16, 16
    a = jax.random.uniform(k1, (B, C, H, W), jnp.float32, 1e-3, 1.0)
    b = jax.random.uniform(k2, (B, C, H, W), jnp.float32, 1e-3, 1.0)
    input_dist = a / jnp.sum(a)
    output_dist = b / jnp.sum(b)

    loss = kl_divergence_loss(input_dist, output_dist)
    jax.block_until_ready(loss)

    # Pure-JAX reference of the exact PyTorch semantics.
    ref = jnp.sum(input_dist * jnp.log2(input_dist / output_dist))
    assert jnp.allclose(loss, ref, rtol=1e-5, atol=1e-5), (loss, ref)

    print("KERNEL_OK")
</pallas_src>

<mosaic_0001>
module attributes {stable_mosaic.version = 11 : i64} {
  func.func @_kl_div_kernel(%arg0: i32, %arg1: memref<16x128xf32, #tpu.memory_space<vmem>>, %arg2: memref<16x128xf32, #tpu.memory_space<vmem>>, %arg3: memref<1x128xf32, #tpu.memory_space<vmem>>) attributes {dimension_semantics = [#tpu.dimension_semantics<parallel>], iteration_bounds = array<i64: 1>, scalar_prefetch = 0 : i64, scratch_operands = 0 : i64, tpu.core_type = #tpu.core_type<tc>, window_params = [{transform_indices = @transform_0, window_bounds = array<i64: 16, 128>}, {transform_indices = @transform_1, window_bounds = array<i64: 16, 128>}, {transform_indices = @transform_2, window_bounds = array<i64: 1, 128>}]} {
    %c0 = arith.constant 0 : index
    %c0_0 = arith.constant 0 : index
    %0 = vector.load %arg1[%c0, %c0_0] : memref<16x128xf32, #tpu.memory_space<vmem>>, vector<16x128xf32>
    %c0_1 = arith.constant 0 : index
    %c0_2 = arith.constant 0 : index
    %1 = vector.load %arg2[%c0_1, %c0_2] : memref<16x128xf32, #tpu.memory_space<vmem>>, vector<16x128xf32>
    %2 = arith.divf %0, %1 : vector<16x128xf32>
    %3 = math.log %2 : vector<16x128xf32>
    %cst = arith.constant 1.44269502 : f32
    %4 = vector.broadcast %cst : f32 to vector<16x128xf32>
    %5 = arith.mulf %3, %4 : vector<16x128xf32>
    %6 = arith.mulf %0, %5 : vector<16x128xf32>
    %cst_3 = arith.constant dense<0.000000e+00> : vector<128xf32>
    %7 = vector.multi_reduction <add>, %6, %cst_3 [0] : vector<16x128xf32> to vector<128xf32>
    %8 = vector.shape_cast %7 : vector<128xf32> to vector<1x128xf32>
    %c0_4 = arith.constant 0 : index
    %c0_5 = arith.constant 0 : index
    %9 = vector.load %arg3[%c0_4, %c0_5] : memref<1x128xf32, #tpu.memory_space<vmem>>, vector<1x128xf32>
    tpu.vector_store %arg3[%c0_4, %c0_5], %8 {strides = array<i32>} : memref<1x128xf32, #tpu.memory_space<vmem>>, vector<1x128xf32>,
    return
  }
  func.func @transform_0(%arg0: i32) -> (i32, i32) {
    %c0_i32 = arith.constant 0 : i32
    %c0_i32_0 = arith.constant 0 : i32
    return %arg0, %c0_i32 : i32, i32
  }
  func.func @transform_1(%arg0: i32) -> (i32, i32) {
    %c0_i32 = arith.constant 0 : i32
    %c0_i32_0 = arith.constant 0 : i32
    return %arg0, %c0_i32 : i32, i32
  }
  func.func @transform_2(%arg0: i32) -> (i32, i32) {
    %c0_i32 = arith.constant 0 : i32
    %c0_i32_0 = arith.constant 0 : i32
    return %arg0, %c0_i32 : i32, i32
  }
}

</mosaic_0001>

<llo_original>
// kernel: tpu_custom_call.1
$region0: #{tpu_custom_call.1}
  #allocation0 [shape = 'u32[]', space=smem, size = 0x4, offset = 0x4, fixed_abs, tag = 'smem constant byte address 0x4 - core index']
  #allocation1 [shape = 'u32[144,128]{1,0:T(1,128)}', space=vmem, size = 0x12000, scoped, tag = 'internal scratch']
  %s0 = inlined_call_operand.hbm [shape: f32[16,128], index: 0, kind: input, shape index: {}]
  %s1 = inlined_call_operand.hbm [shape: f32[16,128], index: 1, kind: input, shape index: {}]
  %s2 = inlined_call_operand.hbm [shape: f32[1,128], index: 2, kind: output, shape index: {}]
  %s3 = sld [smem:[#allocation0]]
  $region26: #{tpu_custom_call.1} parent=0
    _
  %s5 = ssub.s32 1, %s3
  %s6 = scalar_select 0, %s5, %s3
  $region1: #{tpu_custom_call.1} parent=0
    #allocation2 [shape = 'u8[8192]{0}', space=vmem, size = 0x2000, scoped, tag = 'input window, operand 0, single buffered']
    #allocation3 [shape = 's32[1]{0}', space=sflag, size = 0x4, scoped, tag = 'scoped memory for tpu_custom_call.1']
    #allocation4 [shape = 's32[1]{0}', space=sflag, size = 0x4, scoped, tag = 'scoped memory for tpu_custom_call.1']
    #allocation5 [shape = 'u8[8192]{0}', space=vmem, size = 0x2000, scoped, tag = 'input window, operand 1, single buffered']
    #allocation6 [shape = 's32[1]{0}', space=sflag, size = 0x4, scoped, tag = 'scoped memory for tpu_custom_call.1']
    #allocation7 [shape = 'u8[512]{0}', space=vmem, size = 0x400, scoped, tag = 'output window, operand 0, single buffered']
    %7 = vsyncpa [#allocation3], 0
    %8 = vsyncpa [#allocation6], 0
    %9 = vsyncpa [#allocation4], 0
    // Predicated region
    $region2: #{tpu_custom_call.1} parent=1 // pred_check
      _
    $region3: #{tpu_custom_call.1} parent=1 // pred_check_branch
      %11 = sbr.rel (0) target = $region5
    $region4: #{tpu_custom_call.1} parent=1 // pred_region
      %s13 = ssub.s32 256, 256
      %14 = vsyncadd [#allocation3], %s13
      %s15 = sshll.u32 [#allocation2], 4
      %s16 = int_to_ptr.vmem [resolvable:$true] %s15
      %21 = dma.hbm_to_vmem [thread:$0]  %s0, 256, %s16, [#allocation3], 128, 128, 8
    $region5: #{tpu_custom_call.1} parent=1 // pred_fallthru
      _
    // Predicated region
    $region6: #{tpu_custom_call.1} parent=1 // pred_check
      _
    $region7: #{tpu_custom_call.1} parent=1 // pred_check_branch
      %23 = sbr.rel (0) target = $region9
    $region8: #{tpu_custom_call.1} parent=1 // pred_region
      %s25 = ssub.s32 256, 256
      %26 = vsyncadd [#allocation6], %s25
      %s27 = sshll.u32 [#allocation5], 4
      %s28 = int_to_ptr.vmem [resolvable:$true] %s27
      %33 = dma.hbm_to_vmem [thread:$0]  %s1, 256, %s28, [#allocation6], 128, 128, 8
    $region9: #{tpu_custom_call.1} parent=1 // pred_fallthru
      _
    // Predicated region
    $region10: #{tpu_custom_call.1} parent=1 // pred_check
      _
    $region11: #{tpu_custom_call.1} parent=1 // pred_check_branch
      %35 = sbr.rel (0) target = $region13
    $region12: #{tpu_custom_call.1} parent=1 // pred_region
      %36 = dma.done [#allocation3], 256
    $region13: #{tpu_custom_call.1} parent=1 // pred_fallthru
      _
    // Predicated region
    $region14: #{tpu_custom_call.1} parent=1 // pred_check
      _
    $region15: #{tpu_custom_call.1} parent=1 // pred_check_branch
      %38 = sbr.rel (0) target = $region17
    $region16: #{tpu_custom_call.1} parent=1 // pred_region
      %39 = dma.done [#allocation6], 256
    $region17: #{tpu_custom_call.1} parent=1 // pred_fallthru
      _
    %v40 = vld [vmem:[#allocation2] sm:$0xff]
    %v41 = vld [vmem:[#allocation2 + $0x8] sm:$0xff]
    %v42 = vld [vmem:[#allocation5] sm:$0xff]
    %v43 = vld [vmem:[#allocation5 + $0x8] sm:$0xff]
    %v44 = vrcp.pop %v42
    %v45 = vmul.f32 %v40, %v44
    %v46 = vrcp.pop %v43
    %v47 = vmul.f32 %v41, %v46
    %v48 = vlog2.pop %v45
    %v49 = vmul.f32 %v48, 0.6931472
    %v50 = vlog2.pop %v47
    %v51 = vmul.f32 %v50, 0.6931472
    %v52 = vmul.f32 %v49, 1.442695
    %v53 = vmul.f32 %v51, 1.442695
    %v54 = vmul.f32 %v40, %v52
    %v55 = vmul.f32 %v41, %v53
    %v56 = vadd.f32 %v54, %v55
    %v57 = vrot.slane %v56, 4
    %v58 = vadd.f32 %v56, %v57
    %v59 = vrot.slane %v58, 2
    %v60 = vadd.f32 %v58, %v59
    %v61 = vrot.slane %v60, 1
    %v62 = vadd.f32 %v60, %v61
    %63 = vst [vmem:[#allocation7] sm:$0x1] %v62
    // Predicated region
    $region18: #{tpu_custom_call.1} parent=1 // pred_check
      _
    $region19: #{tpu_custom_call.1} parent=1 // pred_check_branch
      %65 = sbr.rel (0) target = $region21
    $region20: #{tpu_custom_call.1} parent=1 // pred_region
      %s67 = ssub.s32 16, 16
      %68 = vsyncadd [#allocation4], %s67
      %s70 = sshll.u32 [#allocation7], 4
      %s71 = int_to_ptr.vmem [resolvable:$true] %s70
      %73 = dma.vmem_to_hbm [thread:$0]  %s71, 16, %s2, [#allocation4]
    $region21: #{tpu_custom_call.1} parent=1 // pred_fallthru
      _
    // Predicated region
    $region22: #{tpu_custom_call.1} parent=1 // pred_check
      _
    $region23: #{tpu_custom_call.1} parent=1 // pred_check_branch
      %75 = sbr.rel (0) target = $region25
    $region24: #{tpu_custom_call.1} parent=1 // pred_region
      %76 = dma.done [#allocation4], 16
    $region25: #{tpu_custom_call.1} parent=1 // pred_fallthru
      _
    %77 = vsyncpa [#allocation3], 1
    %78 = vsyncpa [#allocation6], 1
    %79 = vsyncpa [#allocation4], 1

</llo_original>
